<compile_context>
chip_gen: v7x
topology: tpu7x:2x2x1
jax: 0.10.0
libtpu: 0.0.40
codegen_flags: <defaults>
</compile_context>

<pallas_src>
import jax
import jax.numpy as jnp
import numpy as np
from jax.experimental import pallas as pl
from jax.experimental.pallas import tpu as pltpu

LEAKY_SLOPE = 0.01           # nn.LeakyReLU default negative_slope
WEIGHTS_FINAL_INIT = 0.003


def _leaky_relu(x):
    return jnp.where(x > 0, x, LEAKY_SLOPE * x)


def critic_kernel(state_ref, action_ref,
                  w1_ref, b1_ref,
                  w2s_ref, w2a_ref, b2_ref,
                  w3_ref, b3_ref,
                  out_ref):
    # fc_1: Linear(input_size, h0) + LeakyReLU  (bf16 operands, f32 accum)
    h1 = jnp.dot(state_ref[...], w1_ref[...],
                 preferred_element_type=jnp.float32) + b1_ref[...]
    h1 = _leaky_relu(h1)

    # fc_2: Linear(h0 + action_dim, h1) + LeakyReLU, concat split into two
    # matmuls (exactly equivalent to cat((h1, action), dim=1) @ W2^T).
    h2 = (jnp.dot(h1.astype(jnp.bfloat16), w2s_ref[...],
                  preferred_element_type=jnp.float32)
          + jnp.dot(action_ref[...], w2a_ref[...],
                    preferred_element_type=jnp.float32)
          + b2_ref[...])
    h2 = _leaky_relu(h2)

    # fc_3: Linear(h1, 1) as a VPU/XLU reduction (avoid a 1-column MXU push).
    # w3_ref is a (1, h1) f32 row; b3_ref is an SMEM scalar.
    out_ref[...] = (jnp.sum(h2 * w3_ref[...], axis=-1, keepdims=True)
                    + b3_ref[0])


def critic_forward(state, action, params, *, tm=128):
    """state: (B, input_size) f32, action: (B, action_dim) f32 -> (B, 1) f32.

    tm: batch tile. 128 matches the v5e MXU; 256 is also fine on v6e/v7x.
    With hidden widths this small the per-step working set is a few KiB, so
    the default scoped VMEM limit is never a concern on any generation.
    """
    (w1, b1, w2s, w2a, b2, w3_row, b3) = params
    B = state.shape[0]
    Bp = pl.cdiv(B, tm) * tm
    if Bp != B:
        pad = Bp - B
        state = jnp.pad(state, ((0, pad), (0, 0)))
        action = jnp.pad(action, ((0, pad), (0, 0)))

    # bf16 operands for the MXU; biases / final weight row stay f32.
    state_bf = state.astype(jnp.bfloat16)
    action_bf = action.astype(jnp.bfloat16)
    w1_bf = w1.astype(jnp.bfloat16)
    w2s_bf = w2s.astype(jnp.bfloat16)
    w2a_bf = w2a.astype(jnp.bfloat16)

    # Weights: full-array blocks, constant index_map -> VMEM-resident.
    const = lambda shape: pl.BlockSpec(shape, lambda i: (0,) * len(shape))

    out = pl.pallas_call(
        critic_kernel,
        out_shape=jax.ShapeDtypeStruct((Bp, 1), jnp.float32),
        grid=(Bp // tm,),
        in_specs=[
            pl.BlockSpec((tm, state.shape[1]), lambda i: (i, 0)),
            pl.BlockSpec((tm, action.shape[1]), lambda i: (i, 0)),
            const(w1_bf.shape), const(b1.shape),
            const(w2s_bf.shape), const(w2a_bf.shape), const(b2.shape),
            const(w3_row.shape),
            pl.BlockSpec(memory_space=pltpu.MemorySpace.SMEM),   # b3 scalar
        ],
        out_specs=pl.BlockSpec((tm, 1), lambda i: (i, 0)),
        compiler_params=pltpu.CompilerParams(
            dimension_semantics=("parallel",)),
    )(state_bf, action_bf, w1_bf, b1, w2s_bf, w2a_bf, b2, w3_row, b3)
    return out[:B]


def init_critic_params(key, input_size, action_dim, hidden_layers):
    """Deterministic init mirroring the PyTorch module's init scheme.

    PyTorch's fan_in_uniform_init uses tensor.size(-1): for weights that is
    in_features, for biases it is out_features — reproduced exactly here.
    """
    h0, h1 = hidden_layers
    ks = jax.random.split(key, 6)

    def fan_in_uniform(k, shape, fan_in):
        w = 1.0 / np.sqrt(fan_in)
        return jax.random.uniform(k, shape, jnp.float32, -w, w)

    # fc_1: Linear(input_size, h0)
    w1 = fan_in_uniform(ks[0], (input_size, h0), input_size)     # (in, out)
    b1 = fan_in_uniform(ks[1], (1, h0), h0)

    # fc_2: Linear(h0 + action_dim, h1); split weight into state/action parts
    fan2 = h0 + action_dim
    w2_full = fan_in_uniform(ks[2], (fan2, h1), fan2)            # (in, out)
    w2s, w2a = w2_full[:h0, :], w2_full[h0:, :]
    b2 = fan_in_uniform(ks[3], (1, h1), h1)

    # fc_3: Linear(h1, 1) with uniform(-0.003, 0.003); stored as a (1, h1) row
    # for the in-kernel VPU reduction, bias as a (1,) scalar for SMEM.
    w3_row = jax.random.uniform(ks[4], (1, h1), jnp.float32,
                                -WEIGHTS_FINAL_INIT, WEIGHTS_FINAL_INIT)
    b3 = jax.random.uniform(ks[5], (1,), jnp.float32,
                            -WEIGHTS_FINAL_INIT, WEIGHTS_FINAL_INIT)

    return (w1, b1, w2s, w2a, b2, w3_row, b3)


def critic_reference(state, action, params):
    """Pure-JAX reference mirroring the kernel's bf16-operand / f32-accum math."""
    (w1, b1, w2s, w2a, b2, w3_row, b3) = params
    sb = state.astype(jnp.bfloat16)
    ab = action.reshape(-1, action.shape[-1]).astype(jnp.bfloat16)
    h1 = _leaky_relu(jnp.dot(sb, w1.astype(jnp.bfloat16),
                             preferred_element_type=jnp.float32) + b1)
    h2 = _leaky_relu(jnp.dot(h1.astype(jnp.bfloat16), w2s.astype(jnp.bfloat16),
                             preferred_element_type=jnp.float32)
                     + jnp.dot(ab, w2a.astype(jnp.bfloat16),
                               preferred_element_type=jnp.float32)
                     + b2)
    return jnp.sum(h2 * w3_row, axis=-1, keepdims=True) + b3[0]


if __name__ == "__main__":
    input_size = 16
    action_dim = 4
    hidden_layers = (32, 32)
    batch = 200          # not a multiple of the 128 tile -> exercises padding + 2-step grid

    key = jax.random.PRNGKey(0)
    k_state, k_action, k_params = jax.random.split(key, 3)

    state = jax.random.normal(k_state, (batch, input_size), jnp.float32)
    action = jax.random.normal(k_action, (batch, action_dim), jnp.float32)
    params = init_critic_params(k_params, input_size, action_dim, hidden_layers)

    out = critic_forward(state, action, params, tm=128)
    out = jax.block_until_ready(out)

    ref = critic_reference(state, action, params)
    np.testing.assert_allclose(np.asarray(out), np.asarray(ref),
                               rtol=1e-3, atol=1e-4)
    assert out.shape == (batch, 1)
    print("KERNEL_OK")
</pallas_src>

<mosaic_0001>
module attributes {stable_mosaic.version = 11 : i64} {
  func.func @critic_kernel(%arg0: i32, %arg1: memref<128x16xbf16, #tpu.memory_space<vmem>>, %arg2: memref<128x4xbf16, #tpu.memory_space<vmem>>, %arg3: memref<16x32xbf16, #tpu.memory_space<vmem>>, %arg4: memref<1x32xf32, #tpu.memory_space<vmem>>, %arg5: memref<32x32xbf16, #tpu.memory_space<vmem>>, %arg6: memref<4x32xbf16, #tpu.memory_space<vmem>>, %arg7: memref<1x32xf32, #tpu.memory_space<vmem>>, %arg8: memref<1x32xf32, #tpu.memory_space<vmem>>, %arg9: memref<1xf32, #tpu.memory_space<smem>>, %arg10: memref<128x1xf32, #tpu.memory_space<vmem>>) attributes {dimension_semantics = [#tpu.dimension_semantics<parallel>], iteration_bounds = array<i64: 2>, scalar_prefetch = 0 : i64, scratch_operands = 0 : i64, tpu.core_type = #tpu.core_type<tc>, window_params = [{transform_indices = @transform_0, window_bounds = array<i64: 128, 16>}, {transform_indices = @transform_1, window_bounds = array<i64: 128, 4>}, {pipeline_mode = #tpu.pipeline_mode<synchronous>, transform_indices = @transform_2, window_bounds = array<i64: 16, 32>}, {pipeline_mode = #tpu.pipeline_mode<synchronous>, transform_indices = @transform_3, window_bounds = array<i64: 1, 32>}, {pipeline_mode = #tpu.pipeline_mode<synchronous>, transform_indices = @transform_4, window_bounds = array<i64: 32, 32>}, {pipeline_mode = #tpu.pipeline_mode<synchronous>, transform_indices = @transform_5, window_bounds = array<i64: 4, 32>}, {pipeline_mode = #tpu.pipeline_mode<synchronous>, transform_indices = @transform_6, window_bounds = array<i64: 1, 32>}, {pipeline_mode = #tpu.pipeline_mode<synchronous>, transform_indices = @transform_7, window_bounds = array<i64: 1, 32>}, {transform_indices = @transform_8, window_bounds = array<i64: 1>}, {transform_indices = @transform_9, window_bounds = array<i64: 128, 1>}]} {
    %c0 = arith.constant 0 : index
    %c0_0 = arith.constant 0 : index
    %0 = vector.load %arg1[%c0, %c0_0] : memref<128x16xbf16, #tpu.memory_space<vmem>>, vector<128x16xbf16>
    %c0_1 = arith.constant 0 : index
    %c0_2 = arith.constant 0 : index
    %1 = vector.load %arg3[%c0_1, %c0_2] : memref<16x32xbf16, #tpu.memory_space<vmem>>, vector<16x32xbf16>
    %cst = arith.constant dense<0.000000e+00> : vector<128x32xf32>
    %2 = tpu.matmul %0, %1, %cst {dimension_numbers = #tpu.dot_dimension_numbers<[1], [0], [0], [1], [0, 0, 1, 1], [], []>} : vector<128x16xbf16>, vector<16x32xbf16>, vector<128x32xf32> -> vector<128x32xf32>
    %c0_3 = arith.constant 0 : index
    %c0_4 = arith.constant 0 : index
    %3 = vector.load %arg4[%c0_3, %c0_4] : memref<1x32xf32, #tpu.memory_space<vmem>>, vector<1x32xf32>
    %4 = vector.broadcast %3 : vector<1x32xf32> to vector<128x32xf32>
    %5 = arith.addf %2, %4 : vector<128x32xf32>
    %cst_5 = arith.constant 0.000000e+00 : f32
    %6 = vector.broadcast %cst_5 : f32 to vector<128x32xf32>
    %7 = arith.cmpf ogt, %5, %6 : vector<128x32xf32>
    %cst_6 = arith.constant 0.00999999977 : f32
    %8 = vector.broadcast %cst_6 : f32 to vector<128x32xf32>
    %9 = arith.mulf %8, %5 : vector<128x32xf32>
    %10 = arith.select %7, %5, %9 : vector<128x32xi1>, vector<128x32xf32>
    %11 = arith.truncf %10 : vector<128x32xf32> to vector<128x32xbf16>
    %c0_7 = arith.constant 0 : index
    %c0_8 = arith.constant 0 : index
    %12 = vector.load %arg5[%c0_7, %c0_8] : memref<32x32xbf16, #tpu.memory_space<vmem>>, vector<32x32xbf16>
    %cst_9 = arith.constant dense<0.000000e+00> : vector<128x32xf32>
    %13 = tpu.matmul %11, %12, %cst_9 {dimension_numbers = #tpu.dot_dimension_numbers<[1], [0], [0], [1], [0, 0, 1, 1], [], []>} : vector<128x32xbf16>, vector<32x32xbf16>, vector<128x32xf32> -> vector<128x32xf32>
    %c0_10 = arith.constant 0 : index
    %c0_11 = arith.constant 0 : index
    %14 = vector.load %arg2[%c0_10, %c0_11] : memref<128x4xbf16, #tpu.memory_space<vmem>>, vector<128x4xbf16>
    %c0_12 = arith.constant 0 : index
    %c0_13 = arith.constant 0 : index
    %15 = vector.load %arg6[%c0_12, %c0_13] : memref<4x32xbf16, #tpu.memory_space<vmem>>, vector<4x32xbf16>
    %cst_14 = arith.constant dense<0.000000e+00> : vector<128x32xf32>
    %16 = tpu.matmul %14, %15, %cst_14 {dimension_numbers = #tpu.dot_dimension_numbers<[1], [0], [0], [1], [0, 0, 1, 1], [], []>} : vector<128x4xbf16>, vector<4x32xbf16>, vector<128x32xf32> -> vector<128x32xf32>
    %17 = arith.addf %13, %16 : vector<128x32xf32>
    %c0_15 = arith.constant 0 : index
    %c0_16 = arith.constant 0 : index
    %18 = vector.load %arg7[%c0_15, %c0_16] : memref<1x32xf32, #tpu.memory_space<vmem>>, vector<1x32xf32>
    %19 = vector.broadcast %18 : vector<1x32xf32> to vector<128x32xf32>
    %20 = arith.addf %17, %19 : vector<128x32xf32>
    %cst_17 = arith.constant 0.000000e+00 : f32
    %21 = vector.broadcast %cst_17 : f32 to vector<128x32xf32>
    %22 = arith.cmpf ogt, %20, %21 : vector<128x32xf32>
    %cst_18 = arith.constant 0.00999999977 : f32
    %23 = vector.broadcast %cst_18 : f32 to vector<128x32xf32>
    %24 = arith.mulf %23, %20 : vector<128x32xf32>
    %25 = arith.select %22, %20, %24 : vector<128x32xi1>, vector<128x32xf32>
    %c0_19 = arith.constant 0 : index
    %c0_20 = arith.constant 0 : index
    %26 = vector.load %arg8[%c0_19, %c0_20] : memref<1x32xf32, #tpu.memory_space<vmem>>, vector<1x32xf32>
    %27 = vector.broadcast %26 : vector<1x32xf32> to vector<128x32xf32>
    %28 = arith.mulf %25, %27 : vector<128x32xf32>
    %cst_21 = arith.constant dense<0.000000e+00> : vector<128xf32>
    %29 = vector.multi_reduction <add>, %28, %cst_21 [1] : vector<128x32xf32> to vector<128xf32>
    %30 = vector.shape_cast %29 : vector<128xf32> to vector<128x1xf32>
    %c0_22 = arith.constant 0 : index
    %31 = memref.load %arg9[%c0_22] : memref<1xf32, #tpu.memory_space<smem>>
    %32 = vector.broadcast %31 : f32 to vector<128x1xf32>
    %33 = arith.addf %30, %32 : vector<128x1xf32>
    %c0_23 = arith.constant 0 : index
    %c0_24 = arith.constant 0 : index
    %34 = vector.load %arg10[%c0_23, %c0_24] : memref<128x1xf32, #tpu.memory_space<vmem>>, vector<128x1xf32>
    tpu.vector_store %arg10[%c0_23, %c0_24], %33 {strides = array<i32>} : memref<128x1xf32, #tpu.memory_space<vmem>>, vector<128x1xf32>,
    return
  }
  func.func @transform_0(%arg0: i32) -> (i32, i32) {
    %c0_i32 = arith.constant 0 : i32
    %c0_i32_0 = arith.constant 0 : i32
    return %arg0, %c0_i32 : i32, i32
  }
  func.func @transform_1(%arg0: i32) -> (i32, i32) {
    %c0_i32 = arith.constant 0 : i32
    %c0_i32_0 = arith.constant 0 : i32
    return %arg0, %c0_i32 : i32, i32
  }
  func.func @transform_2(%arg0: i32) -> (i32, i32) {
    %c0_i32 = arith.constant 0 : i32
    %c0_i32_0 = arith.constant 0 : i32
    %c0_i32_1 = arith.constant 0 : i32
    return %c0_i32, %c0_i32_0 : i32, i32
  }
  func.func @transform_3(%arg0: i32) -> (i32, i32) {
    %c0_i32 = arith.constant 0 : i32
    %c0_i32_0 = arith.constant 0 : i32
    %c0_i32_1 = arith.constant 0 : i32
    return %c0_i32, %c0_i32_0 : i32, i32
  }
  func.func @transform_4(%arg0: i32) -> (i32, i32) {
    %c0_i32 = arith.constant 0 : i32
    %c0_i32_0 = arith.constant 0 : i32
    %c0_i32_1 = arith.constant 0 : i32
    return %c0_i32, %c0_i32_0 : i32, i32
  }
  func.func @transform_5(%arg0: i32) -> (i32, i32) {
    %c0_i32 = arith.constant 0 : i32
    %c0_i32_0 = arith.constant 0 : i32
    %c0_i32_1 = arith.constant 0 : i32
    return %c0_i32, %c0_i32_0 : i32, i32
  }
  func.func @transform_6(%arg0: i32) -> (i32, i32) {
    %c0_i32 = arith.constant 0 : i32
    %c0_i32_0 = arith.constant 0 : i32
    %c0_i32_1 = arith.constant 0 : i32
    return %c0_i32, %c0_i32_0 : i32, i32
  }
  func.func @transform_7(%arg0: i32) -> (i32, i32) {
    %c0_i32 = arith.constant 0 : i32
    %c0_i32_0 = arith.constant 0 : i32
    %c0_i32_1 = arith.constant 0 : i32
    return %c0_i32, %c0_i32_0 : i32, i32
  }
  func.func @transform_8(%arg0: i32) -> i32 {
    %c0_i32 = arith.constant 0 : i32
    %c0_i32_0 = arith.constant 0 : i32
    return %c0_i32 : i32
  }
  func.func @transform_9(%arg0: i32) -> (i32, i32) {
    %c0_i32 = arith.constant 0 : i32
    %c0_i32_0 = arith.constant 0 : i32
    return %arg0, %c0_i32 : i32, i32
  }
}

</mosaic_0001>

<llo_original>
// kernel: tpu_custom_call.1
$region0: #{tpu_custom_call.1}
  #allocation0 [shape = 'u32[]', space=smem, size = 0x4, offset = 0x4, fixed_abs, tag = 'smem constant byte address 0x4 - core index']
  #allocation1 [shape = 'u32[144,128]{1,0:T(1,128)}', space=vmem, size = 0x12000, scoped, tag = 'internal scratch']
  #allocation2 [shape = 'f32[1]{0:T(128)S(6)}', space=smem, size = 0x200, scoped, tag = 'scoped memory for tpu_custom_call.1']
  %s0 = inlined_call_operand.vmem [shape: bf16[256,16], index: 0, kind: input, shape index: {}]
  %s1 = inlined_call_operand.vmem [shape: bf16[256,4], index: 1, kind: input, shape index: {}]
  %s2 = inlined_call_operand.vmem [shape: bf16[16,32], index: 2, kind: input, shape index: {}]
  %s3 = inlined_call_operand.vmem [shape: f32[1,32], index: 3, kind: input, shape index: {}]
  %s4 = inlined_call_operand.vmem [shape: bf16[32,32], index: 4, kind: input, shape index: {}]
  %s5 = inlined_call_operand.vmem [shape: bf16[4,32], index: 5, kind: input, shape index: {}]
  %s6 = inlined_call_operand.vmem [shape: f32[1,32], index: 6, kind: input, shape index: {}]
  %s7 = inlined_call_operand.vmem [shape: f32[1,32], index: 7, kind: input, shape index: {}]
  %s8 = inlined_call_operand.<no memory space> [shape: f32[1], index: 8, kind: input, shape index: {}]
  %s9 = inlined_call_operand.vmem [shape: f32[256,1], index: 9, kind: output, shape index: {}]
  %s10 = sld [smem:[#allocation0]]
  $region69: #{tpu_custom_call.1} parent=0
    _
  %s12 = ssub.s32 1, %s10
  %s13 = scalar_select 0, %s12, %s10
  %14 = sst [smem:[#allocation2]] %s8
  loop: start=0, step=1, limit=4
  $region2: #{tpu_custom_call.1} parent=0 // loop_pre_header
    _
  $region3: #{tpu_custom_call.1} parent=0 // loop_header
    %s16 = sphi 0, %s20
    %p17 = scmp.ge.s32.totalorder %s16, 4
    %s26 = sphi 0, %s28
    %s29 = sphi 0, %s26
    %s30 = sphi 0, %s29
    %s46 = sphi 0, %s30
    %s52 = sphi 0, %s54
    %s55 = sphi 0, %s52
    %s56 = sphi 0, %s55
    %s72 = sphi 0, %s56
    %s76 = sphi 0, %s76
    %s78 = sphi 0, %s76
    %s79 = sphi 0, %s78
    %s93 = sphi 0, %s79
    %s97 = sphi 0, %s97
    %s99 = sphi 0, %s97
    %s100 = sphi 0, %s99
    %s114 = sphi 0, %s100
    %s118 = sphi 0, %s118
    %s120 = sphi 0, %s118
    %s121 = sphi 0, %s120
    %s135 = sphi 0, %s121
    %s139 = sphi 0, %s139
    %s141 = sphi 0, %s139
    %s142 = sphi 0, %s141
    %s156 = sphi 0, %s142
    %s160 = sphi 0, %s160
    %s162 = sphi 0, %s160
    %s163 = sphi 0, %s162
    %s177 = sphi 0, %s163
    %s181 = sphi 0, %s181
    %s183 = sphi 0, %s181
    %s184 = sphi 0, %s183
    %s198 = sphi 0, %s184
    %s202 = sphi 0, %s202
    %s204 = sphi 0, %s202
    %s205 = sphi 0, %s204
    %s219 = sphi 0, %s205
    %s225 = sphi 0, %s227
    %s228 = sphi 0, %s225
    %s229 = sphi 0, %s228
    %s245 = sphi 0, %s229
  $region4: #{tpu_custom_call.1} parent=0 // loop_header_branch
    %19 = sbr.rel (%p17) target = $region8
  $region5: #{tpu_custom_call.1} parent=0 // loop_body
    %s21 = ssub.s32 %s16, 1
    %s22 = ssub.s32 %s16, 2
    %s23 = sadd.s32 %s16, 1
    %s24 = ssub.s32 %s16, %s23
    %p25 = scmp.eq.s32.totalorder %s24, 0
    %s27 = sadd.s32 %s26, 1
    %s28 = scalar_select %p25, %s26, %s27
    %p31 = pneg %p25
    %p32 = scmp.eq.s32.totalorder %s16, 1
    %p33 = por %p31, %p32
    %p34 = scmp.ne.s32.totalorder %s26, %s29
    %p35 = scmp.eq.s32.totalorder %s16, 0
    %p36 = por %p34, %p35
    %p37 = scmp.ne.s32.totalorder %s26, %s29
    %p38 = scmp.eq.s32.totalorder %s21, 1
    %p39 = por %p37, %p38
    %p40 = scmp.ne.s32.totalorder %s29, %s30
    %p41 = scmp.eq.s32.totalorder %s21, 0
    %p42 = por %p40, %p41
    %p43 = scmp.ne.s32.totalorder %s29, %s30
    %p44 = scmp.eq.s32.totalorder %s22, 1
    %p45 = por %p43, %p44
    %p47 = scmp.ne.s32.totalorder %s30, %s46
    %p48 = scmp.eq.s32.totalorder %s22, 0
    %p49 = por %p47, %p48
    %s50 = ssub.s32 %s16, %s23
    %p51 = scmp.eq.s32.totalorder %s50, 0
    %s53 = sadd.s32 %s52, 1
    %s54 = scalar_select %p51, %s52, %s53
    %p57 = pneg %p51
    %p58 = scmp.eq.s32.totalorder %s16, 1
    %p59 = por %p57, %p58
    %p60 = scmp.ne.s32.totalorder %s52, %s55
    %p61 = scmp.eq.s32.totalorder %s16, 0
    %p62 = por %p60, %p61
    %p63 = scmp.ne.s32.totalorder %s52, %s55
    %p64 = scmp.eq.s32.totalorder %s21, 1
    %p65 = por %p63, %p64
    %p66 = scmp.ne.s32.totalorder %s55, %s56
    %p67 = scmp.eq.s32.totalorder %s21, 0
    %p68 = por %p66, %p67
    %p69 = scmp.ne.s32.totalorder %s55, %s56
    %p70 = scmp.eq.s32.totalorder %s22, 1
    %p71 = por %p69, %p70
    %p73 = scmp.ne.s32.totalorder %s56, %s72
    %p74 = scmp.eq.s32.totalorder %s22, 0
    %p75 = por %p73, %p74
    %s77 = sadd.s32 %s76, 1
    %p80 = scmp.eq.s32.totalorder %s16, 1
    %p81 = scmp.ne.s32.totalorder %s76, %s78
    %p82 = scmp.eq.s32.totalorder %s16, 0
    %p83 = por %p81, %p82
    %p84 = scmp.ne.s32.totalorder %s76, %s78
    %p85 = scmp.eq.s32.totalorder %s21, 1
    %p86 = por %p84, %p85
    %p87 = scmp.ne.s32.totalorder %s78, %s79
    %p88 = scmp.eq.s32.totalorder %s21, 0
    %p89 = por %p87, %p88
    %p90 = scmp.ne.s32.totalorder %s78, %s79
    %p91 = scmp.eq.s32.totalorder %s22, 1
    %p92 = por %p90, %p91
    %p94 = scmp.ne.s32.totalorder %s79, %s93
    %p95 = scmp.eq.s32.totalorder %s22, 0
    %p96 = por %p94, %p95
    %s98 = sadd.s32 %s97, 1
    %p101 = scmp.eq.s32.totalorder %s16, 1
    %p102 = scmp.ne.s32.totalorder %s97, %s99
    %p103 = scmp.eq.s32.totalorder %s16, 0
    %p104 = por %p102, %p103
    %p105 = scmp.ne.s32.totalorder %s97, %s99
    %p106 = scmp.eq.s32.totalorder %s21, 1
    %p107 = por %p105, %p106
    %p108 = scmp.ne.s32.totalorder %s99, %s100
    %p109 = scmp.eq.s32.totalorder %s21, 0
    %p110 = por %p108, %p109
    %p111 = scmp.ne.s32.totalorder %s99, %s100
    %p112 = scmp.eq.s32.totalorder %s22, 1
    %p113 = por %p111, %p112
    %p115 = scmp.ne.s32.totalorder %s100, %s114
    %p116 = scmp.eq.s32.totalorder %s22, 0
    %p117 = por %p115, %p116
    %s119 = sadd.s32 %s118, 1
    %p122 = scmp.eq.s32.totalorder %s16, 1
    %p123 = scmp.ne.s32.totalorder %s118, %s120
    %p124 = scmp.eq.s32.totalorder %s16, 0
    %p125 = por %p123, %p124
    %p126 = scmp.ne.s32.totalorder %s118, %s120
    %p127 = scmp.eq.s32.totalorder %s21, 1
    %p128 = por %p126, %p127
    %p129 = scmp.ne.s32.totalorder %s120, %s121
    %p130 = scmp.eq.s32.totalorder %s21, 0
    %p131 = por %p129, %p130
    %p132 = scmp.ne.s32.totalorder %s120, %s121
    %p133 = scmp.eq.s32.totalorder %s22, 1
    %p134 = por %p132, %p133
    %p136 = scmp.ne.s32.totalorder %s121, %s135
    %p137 = scmp.eq.s32.totalorder %s22, 0
    %p138 = por %p136, %p137
    %s140 = sadd.s32 %s139, 1
    %p143 = scmp.eq.s32.totalorder %s16, 1
    %p144 = scmp.ne.s32.totalorder %s139, %s141
    %p145 = scmp.eq.s32.totalorder %s16, 0
    %p146 = por %p144, %p145
    %p147 = scmp.ne.s32.totalorder %s139, %s141
    %p148 = scmp.eq.s32.totalorder %s21, 1
    %p149 = por %p147, %p148
    %p150 = scmp.ne.s32.totalorder %s141, %s142
    %p151 = scmp.eq.s32.totalorder %s21, 0
    %p152 = por %p150, %p151
    %p153 = scmp.ne.s32.totalorder %s141, %s142
    %p154 = scmp.eq.s32.totalorder %s22, 1
    %p155 = por %p153, %p154
    %p157 = scmp.ne.s32.totalorder %s142, %s156
    %p158 = scmp.eq.s32.totalorder %s22, 0
    %p159 = por %p157, %p158
    %s161 = sadd.s32 %s160, 1
    %p164 = scmp.eq.s32.totalorder %s16, 1
    %p165 = scmp.ne.s32.totalorder %s160, %s162
    %p166 = scmp.eq.s32.totalorder %s16, 0
    %p167 = por %p165, %p166
    %p168 = scmp.ne.s32.totalorder %s160, %s162
    %p169 = scmp.eq.s32.totalorder %s21, 1
    %p170 = por %p168, %p169
    %p171 = scmp.ne.s32.totalorder %s162, %s163
    %p172 = scmp.eq.s32.totalorder %s21, 0
    %p173 = por %p171, %p172
    %p174 = scmp.ne.s32.totalorder %s162, %s163
    %p175 = scmp.eq.s32.totalorder %s22, 1
    %p176 = por %p174, %p175
    %p178 = scmp.ne.s32.totalorder %s163, %s177
    %p179 = scmp.eq.s32.totalorder %s22, 0
    %p180 = por %p178, %p179
    %s182 = sadd.s32 %s181, 1
    %p185 = scmp.eq.s32.totalorder %s16, 1
    %p186 = scmp.ne.s32.totalorder %s181, %s183
    %p187 = scmp.eq.s32.totalorder %s16, 0
    %p188 = por %p186, %p187
    %p189 = scmp.ne.s32.totalorder %s181, %s183
    %p190 = scmp.eq.s32.totalorder %s21, 1
    %p191 = por %p189, %p190
    %p192 = scmp.ne.s32.totalorder %s183, %s184
    %p193 = scmp.eq.s32.totalorder %s21, 0
    %p194 = por %p192, %p193
    %p195 = scmp.ne.s32.totalorder %s183, %s184
    %p196 = scmp.eq.s32.totalorder %s22, 1
    %p197 = por %p195, %p196
    %p199 = scmp.ne.s32.totalorder %s184, %s198
    %p200 = scmp.eq.s32.totalorder %s22, 0
    %p201 = por %p199, %p200
    %s203 = sadd.s32 %s202, 1
    %p206 = scmp.eq.s32.totalorder %s16, 1
    %p207 = scmp.ne.s32.totalorder %s202, %s204
    %p208 = scmp.eq.s32.totalorder %s16, 0
    %p209 = por %p207, %p208
    %p210 = scmp.ne.s32.totalorder %s202, %s204
    %p211 = scmp.eq.s32.totalorder %s21, 1
    %p212 = por %p210, %p211
    %p213 = scmp.ne.s32.totalorder %s204, %s205
    %p214 = scmp.eq.s32.totalorder %s21, 0
    %p215 = por %p213, %p214
    %p216 = scmp.ne.s32.totalorder %s204, %s205
    %p217 = scmp.eq.s32.totalorder %s22, 1
    %p218 = por %p216, %p217
    %p220 = scmp.ne.s32.totalorder %s205, %s219
    %p221 = scmp.eq.s32.totalorder %s22, 0
    %p222 = por %p220, %p221
    %s223 = ssub.s32 %s16, %s23
    %p224 = scmp.eq.s32.totalorder %s223, 0
    %s226 = sadd.s32 %s225, 1
    %s227 = scalar_select %p224, %s225, %s226
    %p230 = pneg %p224
    %p231 = scmp.eq.s32.totalorder %s16, 1
    %p232 = por %p230, %p231
    %p233 = scmp.ne.s32.totalorder %s225, %s228
    %p234 = scmp.eq.s32.totalorder %s16, 0
    %p235 = por %p233, %p234
    %p236 = scmp.ne.s32.totalorder %s225, %s228
    %p237 = scmp.eq.s32.totalorder %s21, 1
    %p238 = por %p236, %p237
    %p239 = scmp.ne.s32.totalorder %s228, %s229
    %p240 = scmp.eq.s32.totalorder %s21, 0
    %p241 = por %p239, %p240
    %p242 = scmp.ne.s32.totalorder %s228, %s229
    %p243 = scmp.eq.s32.totalorder %s22, 1
    %p244 = por %p242, %p243
    %p246 = scmp.ne.s32.totalorder %s229, %s245
    %p247 = scmp.eq.s32.totalorder %s22, 0
    %p248 = por %p246, %p247
    %p249 = scmp.le.s32.totalorder 1, %s16
    %p250 = scmp.lt.s32.totalorder %s16, 3
    %p251 = pnand %p249, %p250
    %p252 = pneg %p251
    // Predicated region
    $region9: #{tpu_custom_call.1} parent=5 // pred_check
      _
    $region10: #{tpu_custom_call.1} parent=5 // pred_check_branch
      %254 = sbr.rel (%p251) target = $region12
    $region11: #{tpu_custom_call.1} parent=5 // pred_region
      %s255 = ssub.s32 %s16, 1
      // Predicated region
      $region13: #{tpu_custom_call.1} parent=11 // pred_check
        %p256 = pneg %p89
      $region14: #{tpu_custom_call.1} parent=11 // pred_check_branch
        %258 = sbr.rel (%p256) target = $region16
      $region15: #{tpu_custom_call.1} parent=11 // pred_region
        _
      $region16: #{tpu_custom_call.1} parent=11 // pred_fallthru
        _
      // Predicated region
      $region17: #{tpu_custom_call.1} parent=11 // pred_check
        %p259 = pneg %p110
      $region18: #{tpu_custom_call.1} parent=11 // pred_check_branch
        %261 = sbr.rel (%p259) target = $region20
      $region19: #{tpu_custom_call.1} parent=11 // pred_region
        _
      $region20: #{tpu_custom_call.1} parent=11 // pred_fallthru
        _
      // Predicated region
      $region21: #{tpu_custom_call.1} parent=11 // pred_check
        %p262 = pneg %p131
      $region22: #{tpu_custom_call.1} parent=11 // pred_check_branch
        %264 = sbr.rel (%p262) target = $region24
      $region23: #{tpu_custom_call.1} parent=11 // pred_region
        _
      $region24: #{tpu_custom_call.1} parent=11 // pred_fallthru
        _
      // Predicated region
      $region25: #{tpu_custom_call.1} parent=11 // pred_check
        %p265 = pneg %p152
      $region26: #{tpu_custom_call.1} parent=11 // pred_check_branch
        %267 = sbr.rel (%p265) target = $region28
      $region27: #{tpu_custom_call.1} parent=11 // pred_region
        _
      $region28: #{tpu_custom_call.1} parent=11 // pred_fallthru
        _
      // Predicated region
      $region29: #{tpu_custom_call.1} parent=11 // pred_check
        %p268 = pneg %p173
      $region30: #{tpu_custom_call.1} parent=11 // pred_check_branch
        %270 = sbr.rel (%p268) target = $region32
      $region31: #{tpu_custom_call.1} parent=11 // pred_region
        _
      $region32: #{tpu_custom_call.1} parent=11 // pred_fallthru
        _
      // Predicated region
      $region33: #{tpu_custom_call.1} parent=11 // pred_check
        %p271 = pneg %p194
      $region34: #{tpu_custom_call.1} parent=11 // pred_check_branch
        %273 = sbr.rel (%p271) target = $region36
      $region35: #{tpu_custom_call.1} parent=11 // pred_region
        _
      $region36: #{tpu_custom_call.1} parent=11 // pred_fallthru
        _
      // Predicated region
      $region37: #{tpu_custom_call.1} parent=11 // pred_check
        %p274 = pneg %p215
      $region38: #{tpu_custom_call.1} parent=11 // pred_check_branch
        %276 = sbr.rel (%p274) target = $region40
      $region39: #{tpu_custom_call.1} parent=11 // pred_region
        _
      $region40: #{tpu_custom_call.1} parent=11 // pred_fallthru
        _
    $region12: #{tpu_custom_call.1} parent=5 // pred_fallthru
      _
    %p277 = scmp.lt.s32.totalorder %s16, 2
    // Predicated region
    $region41: #{tpu_custom_call.1} parent=5 // pred_check
      %p278 = pneg %p277
    $region42: #{tpu_custom_call.1} parent=5 // pred_check_branch
      %280 = sbr.rel (%p278) target = $region44
    $region43: #{tpu_custom_call.1} parent=5 // pred_region
      // Predicated region
      $region45: #{tpu_custom_call.1} parent=43 // pred_check
        %p281 = pneg %p36
      $region46: #{tpu_custom_call.1} parent=43 // pred_check_branch
        %283 = sbr.rel (%p281) target = $region48
      $region47: #{tpu_custom_call.1} parent=43 // pred_region
        %s284 = smul.u32 16, %s16
        %p285 = scmp.lt.s32.totalorder %s284, 31
        %s286 = scalar_select %p285, %s284, 31
        %s287 = smul.addr %s286, 4
        %s288 = scalar_lea.vmem %s0, %s287
        %s289 = smul.u32 16, %s16
      $region48: #{tpu_custom_call.1} parent=43 // pred_fallthru
        _
      // Predicated region
      $region49: #{tpu_custom_call.1} parent=43 // pred_check
        %p290 = pneg %p62
      $region50: #{tpu_custom_call.1} parent=43 // pred_check_branch
        %292 = sbr.rel (%p290) target = $region52
      $region51: #{tpu_custom_call.1} parent=43 // pred_region
        %s293 = smul.u32 16, %s16
        %p294 = scmp.lt.s32.totalorder %s293, 31
        %s295 = scalar_select %p294, %s293, 31
        %s296 = smul.addr %s295, 4
        %s297 = scalar_lea.vmem %s1, %s296
        %s298 = smul.u32 16, %s16
      $region52: #{tpu_custom_call.1} parent=43 // pred_fallthru
        _
    $region44: #{tpu_custom_call.1} parent=5 // pred_fallthru
      _
    %p299 = scmp.le.s32.totalorder 1, %s16
    %p300 = scmp.lt.s32.totalorder %s16, 3
    %p301 = pnand %p299, %p300
    %p302 = pneg %p301
    // Predicated region
    $region53: #{tpu_custom_call.1} parent=5 // pred_check
      _
    $region54: #{tpu_custom_call.1} parent=5 // pred_check_branch
      %304 = sbr.rel (%p301) target = $region56
    $region55: #{tpu_custom_call.1} parent=5 // pred_region
      %s305 = ssub.s32 %s16, 1
      %s306 = smul.u32 16, %s21
      %p307 = scmp.lt.s32.totalorder %s306, 31
      %s308 = scalar_select %p307, %s306, 31
      %s309 = smul.addr %s308, 4
      %s310 = scalar_lea.vmem %s0, %s309
      %p311 = pneg %p42
      %p312 = pneg %p39
      %s313 = smul.u32 16, %s21
      %p314 = scmp.lt.s32.totalorder %s313, 31
      %s315 = scalar_select %p314, %s313, 31
      %s316 = smul.addr %s315, 4
      %s317 = scalar_lea.vmem %s1, %s316
      %p318 = pneg %p68
      %p319 = pneg %p65
      %p320 = pneg %p89
      %p321 = pneg %p86
      %p322 = pneg %p110
      %p323 = pneg %p107
      %p324 = pneg %p131
      %p325 = pneg %p128
      %p326 = pneg %p152
      %p327 = pneg %p149
      %p328 = pneg %p173
      %p329 = pneg %p170
      %p330 = pneg %p194
      %p331 = pneg %p191
      %p332 = pneg %p215
      %p333 = pneg %p212
      %p334 = pneg %p241
      %p335 = pneg %p238
      %s336 = smul.u32 16, %s21
      %p337 = scmp.lt.s32.totalorder %s336, 31
      %s338 = scalar_select %p337, %s336, 31
      %s339 = smul.addr %s338, 8
      %s340 = scalar_lea.vmem %s9, %s339
      %s341 = smul.u32 16, %s21
      %p342 = scmp.lt.s32.totalorder %s341, 31
      %s343 = scalar_select %p342, %s341, 31
      %s344 = smul.addr %s343, 4
      %s345 = scalar_lea.vmem %s0, %s344
      %s346 = smul.u32 16, %s21
      %s347 = smul.u32 16, %s21
      %p348 = scmp.lt.s32.totalorder %s347, 31
      %s349 = scalar_select %p348, %s347, 31
      %s350 = smul.addr %s349, 4
      %s351 = scalar_lea.vmem %s1, %s350
      %s352 = smul.u32 16, %s21
      %s353 = smul.u32 16, %s21
      %p354 = scmp.lt.s32.totalorder %s353, 31
      %s355 = scalar_select %p354, %s353, 31
      %s356 = smul.addr %s355, 8
      %s357 = scalar_lea.vmem %s9, %s356
      %s358 = smul.u32 16, %s21
      %v360 = vld [vmem:[%s345] sm:$0xf]
      %v361 = vld [vmem:[%s345 + $0x4] sm:$0xf]
      %v362 = vld [vmem:[%s345 + $0x8] sm:$0xf]
      %v363 = vld [vmem:[%s345 + $0xc] sm:$0xf]
      %v364 = vld [vmem:[%s345 + $0x10] sm:$0xf]
      %v365 = vld [vmem:[%s345 + $0x14] sm:$0xf]
      %v366 = vld [vmem:[%s345 + $0x18] sm:$0xf]
      %v367 = vld [vmem:[%s345 + $0x1c] sm:$0xf]
      %v368 = vld [vmem:[%s345 + $0x20] sm:$0xf]
      %v369 = vld [vmem:[%s345 + $0x24] sm:$0xf]
      %v370 = vld [vmem:[%s345 + $0x28] sm:$0xf]
      %v371 = vld [vmem:[%s345 + $0x2c] sm:$0xf]
      %v372 = vld [vmem:[%s345 + $0x30] sm:$0xf]
      %v373 = vld [vmem:[%s345 + $0x34] sm:$0xf]
      %v374 = vld [vmem:[%s345 + $0x38] sm:$0xf]
      %v375 = vld [vmem:[%s345 + $0x3c] sm:$0xf]
      %v376 = vld [vmem:[%s2] sm:$0xf]
      %v377 = vld [vmem:[%s2 + $0x4] sm:$0xf]
      %v378 = vld [vmem:[%s3] sm:$0x1]
      %v380 = vlaneseq
      %v381 = vshrl.u32 %v380, 7
      %v382 = vsub.s32 0, %v381
      %v383 = vrot.slane %v378, %v382
      %v401 = vunpack.c.l.b16 %v360
      %v402 = vunpack.c.l.b16 %v361
      %v403 = vunpack.c.l.b16 %v362
      %v404 = vunpack.c.l.b16 %v363
      %v405 = vunpack.c.l.b16 %v364
      %v406 = vunpack.c.l.b16 %v365
      %v407 = vunpack.c.l.b16 %v366
      %v408 = vunpack.c.l.b16 %v367
      %v409 = vunpack.c.l.b16 %v368
      %v410 = vunpack.c.l.b16 %v369
      %v411 = vunpack.c.l.b16 %v370
      %v412 = vunpack.c.l.b16 %v371
      %v413 = vunpack.c.l.b16 %v372
      %v414 = vunpack.c.l.b16 %v373
      %v415 = vunpack.c.l.b16 %v374
      %v416 = vunpack.c.l.b16 %v375
      %v417 = vpack.c.b16 %v402, %v401
      %v418 = vpack.c.b16 %v404, %v403
      %v419 = vpack.c.b16 %v406, %v405
      %v420 = vpack.c.b16 %v408, %v407
      %v421 = vpack.c.b16 %v410, %v409
      %v422 = vpack.c.b16 %v412, %v411
      %v423 = vpack.c.b16 %v414, %v413
      %v424 = vpack.c.b16 %v416, %v415
      %v427 = vunpack.c.l.b16 %v376
      %v428 = vunpack.c.l.b16 %v377
      %v429 = vpack.c.b16 %v428, %v427
      %vm431 = vcmask 130048
      %v433 = vsel %vm431, %v417, 0
      %v436 = vsel %vm431, %v418, 0
      %v439 = vsel %vm431, %v419, 0
      %v442 = vsel %vm431, %v420, 0
      %v445 = vsel %vm431, %v421, 0
      %v448 = vsel %vm431, %v422, 0
      %v451 = vsel %vm431, %v423, 0
      %v454 = vsel %vm431, %v424, 0
      %456 = vmatprep.subr.bf16.mxu0 0
      %457 = vmatpush1.bf16.msra.mxu0 %v429
      %458 = vmatprep.subr.bf16.mxu0 0
      %459 = vmatpush1.bf16.msra.mxu0 0
      %460 = vmatprep.subr.bf16.mxu0 0
      %461 = vmatpush1.bf16.msra.mxu0 0
      %462 = vmatprep.subr.bf16.mxu0 0
      %463 = vmatpush1.bf16.msra.mxu0 0
      %464 = vmatprep.subr.bf16.mxu0 0
      %465 = vmatpush1.bf16.msra.mxu0 0
      %466 = vmatprep.subr.bf16.mxu0 0
      %467 = vmatpush1.bf16.msra.mxu0 0
      %468 = vmatprep.subr.bf16.mxu0 0
      %469 = vmatpush1.bf16.msra.mxu0 0
      %470 = vmatprep.subr.bf16.mxu0 0
      %471 = vmatpush1.bf16.msra.mxu0 0
      %472 = vmatprep.subr.bf16.mxu0 0
      %473 = vmatpush1.bf16.msra.mxu0 0
      %474 = vmatprep.subr.bf16.mxu0 0
      %475 = vmatpush1.bf16.msra.mxu0 0
      %476 = vmatprep.subr.bf16.mxu0 0
      %477 = vmatpush1.bf16.msra.mxu0 0
      %478 = vmatprep.subr.bf16.mxu0 0
      %479 = vmatpush1.bf16.msra.mxu0 0
      %480 = vmatprep.subr.bf16.mxu0 0
      %481 = vmatpush1.bf16.msra.mxu0 0
      %482 = vmatprep.subr.bf16.mxu0 0
      %483 = vmatpush1.bf16.msra.mxu0 0
      %484 = vmatprep.subr.bf16.mxu0 0
      %485 = vmatpush1.bf16.msra.mxu0 0
      %486 = vmatprep.subr.bf16.mxu0 0
      %487 = vmatpush1.bf16.msra.mxu0 0
      %488 = vmatprep.mubr.bf16.mxu0 0
      %489 = vmatmul.mubr.bf16.gmra.mrb[0].mxu0 %v433
      %v490 = vpop.f32.mrb[0].mxu0
      %v491 = vadd.f32 %v383, %v490
      %v492 = vpop.f32.mrb[0].mxu0
      %v493 = vpop.f32.mrb[0].mxu0
      %v494 = vadd.f32 %v383, %v493
      %v495 = vpop.f32.mrb[0].mxu0
      %496 = vmatprep.mubr.bf16.mxu0 0
      %497 = vmatmul.mubr.bf16.gmra.mrb[0].mxu0 %v436
      %v498 = vpop.f32.mrb[0].mxu0
      %v499 = vadd.f32 %v383, %v498
      %v500 = vpop.f32.mrb[0].mxu0
      %v501 = vpop.f32.mrb[0].mxu0
      %v502 = vadd.f32 %v383, %v501
      %v503 = vpop.f32.mrb[0].mxu0
      %504 = vmatprep.mubr.bf16.mxu0 0
      %505 = vmatmul.mubr.bf16.gmra.mrb[0].mxu0 %v439
      %v506 = vpop.f32.mrb[0].mxu0
      %v507 = vadd.f32 %v383, %v506
      %v508 = vpop.f32.mrb[0].mxu0
      %v509 = vpop.f32.mrb[0].mxu0
      %v510 = vadd.f32 %v383, %v509
      %v511 = vpop.f32.mrb[0].mxu0
      %512 = vmatprep.mubr.bf16.mxu0 0
      %513 = vmatmul.mubr.bf16.gmra.mrb[0].mxu0 %v442
      %v514 = vpop.f32.mrb[0].mxu0
      %v515 = vadd.f32 %v383, %v514
      %v516 = vpop.f32.mrb[0].mxu0
      %v517 = vpop.f32.mrb[0].mxu0
      %v518 = vadd.f32 %v383, %v517
      %v519 = vpop.f32.mrb[0].mxu0
      %520 = vmatprep.mubr.bf16.mxu0 0
      %521 = vmatmul.mubr.bf16.gmra.mrb[0].mxu0 %v445
      %v522 = vpop.f32.mrb[0].mxu0
      %v523 = vadd.f32 %v383, %v522
      %v524 = vpop.f32.mrb[0].mxu0
      %v525 = vpop.f32.mrb[0].mxu0
      %v526 = vadd.f32 %v383, %v525
      %v527 = vpop.f32.mrb[0].mxu0
      %528 = vmatprep.mubr.bf16.mxu0 0
      %529 = vmatmul.mubr.bf16.gmra.mrb[0].mxu0 %v448
      %v530 = vpop.f32.mrb[0].mxu0
      %v531 = vadd.f32 %v383, %v530
      %v532 = vpop.f32.mrb[0].mxu0
      %v533 = vpop.f32.mrb[0].mxu0
      %v534 = vadd.f32 %v383, %v533
      %v535 = vpop.f32.mrb[0].mxu0
      %536 = vmatprep.mubr.bf16.mxu0 0
      %537 = vmatmul.mubr.bf16.gmra.mrb[0].mxu0 %v451
      %v538 = vpop.f32.mrb[0].mxu0
      %v539 = vadd.f32 %v383, %v538
      %v540 = vpop.f32.mrb[0].mxu0
      %v541 = vpop.f32.mrb[0].mxu0
      %v542 = vadd.f32 %v383, %v541
      %v543 = vpop.f32.mrb[0].mxu0
      %544 = vmatprep.mubr.bf16.mxu0 0
      %545 = vmatmul.mubr.bf16.gmra.mrb[0].mxu0 %v454
      %v546 = vpop.f32.mrb[0].mxu0
      %v547 = vadd.f32 %v383, %v546
      %v548 = vpop.f32.mrb[0].mxu0
      %v549 = vpop.f32.mrb[0].mxu0
      %v550 = vadd.f32 %v383, %v549
      %v551 = vpop.f32.mrb[0].mxu0
      %552 = vdwg.mxu0
      %vm553 = vcmp.gt.f32.partialorder %v491, 0.0
      %vm554 = vcmp.gt.f32.partialorder %v494, 0.0
      %vm555 = vcmp.gt.f32.partialorder %v499, 0.0
      %vm556 = vcmp.gt.f32.partialorder %v502, 0.0
      %vm557 = vcmp.gt.f32.partialorder %v507, 0.0
      %vm558 = vcmp.gt.f32.partialorder %v510, 0.0
      %vm559 = vcmp.gt.f32.partialorder %v515, 0.0
      %vm560 = vcmp.gt.f32.partialorder %v518, 0.0
      %vm561 = vcmp.gt.f32.partialorder %v523, 0.0
      %vm562 = vcmp.gt.f32.partialorder %v526, 0.0
      %vm563 = vcmp.gt.f32.partialorder %v531, 0.0
      %vm564 = vcmp.gt.f32.partialorder %v534, 0.0
      %vm565 = vcmp.gt.f32.partialorder %v539, 0.0
      %vm566 = vcmp.gt.f32.partialorder %v542, 0.0
      %vm567 = vcmp.gt.f32.partialorder %v547, 0.0
      %vm568 = vcmp.gt.f32.partialorder %v550, 0.0
      %v569 = vmul.f32 %v491, 0.01
      %v570 = vmul.f32 %v494, 0.01
      %v571 = vmul.f32 %v499, 0.01
      %v572 = vmul.f32 %v502, 0.01
      %v573 = vmul.f32 %v507, 0.01
      %v574 = vmul.f32 %v510, 0.01
      %v575 = vmul.f32 %v515, 0.01
      %v576 = vmul.f32 %v518, 0.01
      %v577 = vmul.f32 %v523, 0.01
      %v578 = vmul.f32 %v526, 0.01
      %v579 = vmul.f32 %v531, 0.01
      %v580 = vmul.f32 %v534, 0.01
      %v581 = vmul.f32 %v539, 0.01
      %v582 = vmul.f32 %v542, 0.01
      %v583 = vmul.f32 %v547, 0.01
      %v584 = vmul.f32 %v550, 0.01
      %v585 = vsel %vm553, %v491, %v569
      %v586 = vsel %vm554, %v494, %v570
      %v587 = vsel %vm555, %v499, %v571
      %v588 = vsel %vm556, %v502, %v572
      %v589 = vsel %vm557, %v507, %v573
      %v590 = vsel %vm558, %v510, %v574
      %v591 = vsel %vm559, %v515, %v575
      %v592 = vsel %vm560, %v518, %v576
      %v593 = vsel %vm561, %v523, %v577
      %v594 = vsel %vm562, %v526, %v578
      %v595 = vsel %vm563, %v531, %v579
      %v596 = vsel %vm564, %v534, %v580
      %v597 = vsel %vm565, %v539, %v581
      %v598 = vsel %vm566, %v542, %v582
      %v599 = vsel %vm567, %v547, %v583
      %v600 = vsel %vm568, %v550, %v584
      %v601 = vpack.c.bf16 %v586, %v585
      %v602 = vpack.c.bf16 %v588, %v587
      %v603 = vpack.c.bf16 %v590, %v589
      %v604 = vpack.c.bf16 %v592, %v591
      %v605 = vpack.c.bf16 %v594, %v593
      %v606 = vpack.c.bf16 %v596, %v595
      %v607 = vpack.c.bf16 %v598, %v597
      %v608 = vpack.c.bf16 %v600, %v599
      %v609 = vld [vmem:[%s4] sm:$0xf]
      %v610 = vld [vmem:[%s4 + $0x4] sm:$0xf]
      %v611 = vld [vmem:[%s4 + $0x8] sm:$0xf]
      %v612 = vld [vmem:[%s4 + $0xc] sm:$0xf]
      %v613 = vld [vmem:[%s351] sm:$0xf]
      %v614 = vld [vmem:[%s351 + $0x4] sm:$0xf]
      %v615 = vld [vmem:[%s351 + $0x8] sm:$0xf]
      %v616 = vld [vmem:[%s351 + $0xc] sm:$0xf]
      %v617 = vld [vmem:[%s351 + $0x10] sm:$0xf]
      %v618 = vld [vmem:[%s351 + $0x14] sm:$0xf]
      %v619 = vld [vmem:[%s351 + $0x18] sm:$0xf]
      %v620 = vld [vmem:[%s351 + $0x1c] sm:$0xf]
      %v621 = vld [vmem:[%s351 + $0x20] sm:$0xf]
      %v622 = vld [vmem:[%s351 + $0x24] sm:$0xf]
      %v623 = vld [vmem:[%s351 + $0x28] sm:$0xf]
      %v624 = vld [vmem:[%s351 + $0x2c] sm:$0xf]
      %v625 = vld [vmem:[%s351 + $0x30] sm:$0xf]
      %v626 = vld [vmem:[%s351 + $0x34] sm:$0xf]
      %v627 = vld [vmem:[%s351 + $0x38] sm:$0xf]
      %v628 = vld [vmem:[%s351 + $0x3c] sm:$0xf]
      %v629 = vld [vmem:[%s5] sm:$0x3]
      %v646 = vunpack.c.l.b16 %v613
      %v647 = vunpack.c.l.b16 %v614
      %v648 = vunpack.c.l.b16 %v615
      %v649 = vunpack.c.l.b16 %v616
      %v650 = vunpack.c.l.b16 %v617
      %v651 = vunpack.c.l.b16 %v618
      %v652 = vunpack.c.l.b16 %v619
      %v653 = vunpack.c.l.b16 %v620
      %v654 = vunpack.c.l.b16 %v621
      %v655 = vunpack.c.l.b16 %v622
      %v656 = vunpack.c.l.b16 %v623
      %v657 = vunpack.c.l.b16 %v624
      %v658 = vunpack.c.l.b16 %v625
      %v659 = vunpack.c.l.b16 %v626
      %v660 = vunpack.c.l.b16 %v627
      %v661 = vunpack.c.l.b16 %v628
      %v662 = vpack.c.b16 %v647, %v646
      %v663 = vpack.c.b16 %v649, %v648
      %v664 = vpack.c.b16 %v651, %v650
      %v665 = vpack.c.b16 %v653, %v652
      %v666 = vpack.c.b16 %v655, %v654
      %v667 = vpack.c.b16 %v657, %v656
      %v668 = vpack.c.b16 %v659, %v658
      %v669 = vpack.c.b16 %v661, %v660
      %vm670 = vcmask 31744
      %v672 = vsel %vm670, %v662, 0
      %v675 = vsel %vm670, %v663, 0
      %v678 = vsel %vm670, %v664, 0
      %v681 = vsel %vm670, %v665, 0
      %v684 = vsel %vm670, %v666, 0
      %v687 = vsel %vm670, %v667, 0
      %v690 = vsel %vm670, %v668, 0
      %v693 = vsel %vm670, %v669, 0
      %vm695 = vcmask 1041408
      %v697 = vsel %vm695, %v629, 0
      %699 = vmatprep.subr.bf16.mxu0 0
      %700 = vmatpush1.bf16.msra.mxu0 %v697
      %701 = vmatprep.subr.bf16.mxu0 0
      %702 = vmatpush1.bf16.msra.mxu0 0
      %703 = vmatprep.subr.bf16.mxu0 0
      %704 = vmatpush1.bf16.msra.mxu0 0
      %705 = vmatprep.subr.bf16.mxu0 0
      %706 = vmatpush1.bf16.msra.mxu0 0
      %707 = vmatprep.subr.bf16.mxu0 0
      %708 = vmatpush1.bf16.msra.mxu0 0
      %709 = vmatprep.subr.bf16.mxu0 0
      %710 = vmatpush1.bf16.msra.mxu0 0
      %711 = vmatprep.subr.bf16.mxu0 0
      %712 = vmatpush1.bf16.msra.mxu0 0
      %713 = vmatprep.subr.bf16.mxu0 0
      %714 = vmatpush1.bf16.msra.mxu0 0
      %715 = vmatprep.subr.bf16.mxu0 0
      %716 = vmatpush1.bf16.msra.mxu0 0
      %717 = vmatprep.subr.bf16.mxu0 0
      %718 = vmatpush1.bf16.msra.mxu0 0
      %719 = vmatprep.subr.bf16.mxu0 0
      %720 = vmatpush1.bf16.msra.mxu0 0
      %721 = vmatprep.subr.bf16.mxu0 0
      %722 = vmatpush1.bf16.msra.mxu0 0
      %723 = vmatprep.subr.bf16.mxu0 0
      %724 = vmatpush1.bf16.msra.mxu0 0
      %725 = vmatprep.subr.bf16.mxu0 0
      %726 = vmatpush1.bf16.msra.mxu0 0
      %727 = vmatprep.subr.bf16.mxu0 0
      %728 = vmatpush1.bf16.msra.mxu0 0
      %729 = vmatprep.subr.bf16.mxu0 0
      %730 = vmatpush1.bf16.msra.mxu0 0
      %731 = vmatprep.mubr.bf16.mxu0 0
      %732 = vmatmul.mubr.bf16.gmra.mrb[0].mxu0 %v672
      %v733 = vpop.f32.mrb[0].mxu0
      %v734 = vadd.f32 0.0, %v733
      %v735 = vpop.f32.mrb[0].mxu0
      %v736 = vpop.f32.mrb[0].mxu0
      %v737 = vadd.f32 0.0, %v736
      %v738 = vpop.f32.mrb[0].mxu0
      %739 = vmatprep.mubr.bf16.mxu0 0
      %740 = vmatmul.mubr.bf16.gmra.mrb[0].mxu0 %v675
      %v741 = vpop.f32.mrb[0].mxu0
      %v742 = vadd.f32 0.0, %v741
      %v743 = vpop.f32.mrb[0].mxu0
      %v744 = vpop.f32.mrb[0].mxu0
      %v745 = vadd.f32 0.0, %v744
      %v746 = vpop.f32.mrb[0].mxu0
      %747 = vmatprep.mubr.bf16.mxu0 0
      %748 = vmatmul.mubr.bf16.gmra.mrb[0].mxu0 %v678
      %v749 = vpop.f32.mrb[0].mxu0
      %v750 = vadd.f32 0.0, %v749
      %v751 = vpop.f32.mrb[0].mxu0
      %v752 = vpop.f32.mrb[0].mxu0
      %v753 = vadd.f32 0.0, %v752
      %v754 = vpop.f32.mrb[0].mxu0
      %755 = vmatprep.mubr.bf16.mxu0 0
      %756 = vmatmul.mubr.bf16.gmra.mrb[0].mxu0 %v681
      %v757 = vpop.f32.mrb[0].mxu0
      %v758 = vadd.f32 0.0, %v757
      %v759 = vpop.f32.mrb[0].mxu0
      %v760 = vpop.f32.mrb[0].mxu0
      %v761 = vadd.f32 0.0, %v760
      %v762 = vpop.f32.mrb[0].mxu0
      %763 = vmatprep.mubr.bf16.mxu0 0
      %764 = vmatmul.mubr.bf16.gmra.mrb[0].mxu0 %v684
      %v765 = vpop.f32.mrb[0].mxu0
      %v766 = vadd.f32 0.0, %v765
      %v767 = vpop.f32.mrb[0].mxu0
      %v768 = vpop.f32.mrb[0].mxu0
      %v769 = vadd.f32 0.0, %v768
      %v770 = vpop.f32.mrb[0].mxu0
      %771 = vmatprep.mubr.bf16.mxu0 0
      %772 = vmatmul.mubr.bf16.gmra.mrb[0].mxu0 %v687
      %v773 = vpop.f32.mrb[0].mxu0
      %v774 = vadd.f32 0.0, %v773
      %v775 = vpop.f32.mrb[0].mxu0
      %v776 = vpop.f32.mrb[0].mxu0
      %v777 = vadd.f32 0.0, %v776
      %v778 = vpop.f32.mrb[0].mxu0
      %779 = vmatprep.mubr.bf16.mxu0 0
      %780 = vmatmul.mubr.bf16.gmra.mrb[0].mxu0 %v690
      %v781 = vpop.f32.mrb[0].mxu0
      %v782 = vadd.f32 0.0, %v781
      %v783 = vpop.f32.mrb[0].mxu0
      %v784 = vpop.f32.mrb[0].mxu0
      %v785 = vadd.f32 0.0, %v784
      %v786 = vpop.f32.mrb[0].mxu0
      %787 = vmatprep.mubr.bf16.mxu0 0
      %788 = vmatmul.mubr.bf16.gmra.mrb[0].mxu0 %v693
      %v789 = vpop.f32.mrb[0].mxu0
      %v790 = vadd.f32 0.0, %v789
      %v791 = vpop.f32.mrb[0].mxu0
      %v792 = vpop.f32.mrb[0].mxu0
      %v793 = vadd.f32 0.0, %v792
      %v794 = vpop.f32.mrb[0].mxu0
      %795 = vdwg.mxu0
      %v800 = vunpack.c.l.b16 %v609
      %v801 = vunpack.c.l.b16 %v610
      %v802 = vunpack.c.l.b16 %v611
      %v803 = vunpack.c.l.b16 %v612
      %v804 = vpack.c.b16 %v801, %v800
      %v805 = vpack.c.b16 %v803, %v802
      %vm808 = vcmask 261120
      %v810 = vsel %vm808, %v601, 0
      %v813 = vsel %vm808, %v602, 0
      %v816 = vsel %vm808, %v603, 0
      %v819 = vsel %vm808, %v604, 0
      %v822 = vsel %vm808, %v605, 0
      %v825 = vsel %vm808, %v606, 0
      %v828 = vsel %vm808, %v607, 0
      %v831 = vsel %vm808, %v608, 0
      %833 = vmatprep.subr.bf16.mxu0 0
      %834 = vmatpush1.bf16.msra.mxu0 %v804
      %835 = vmatprep.subr.bf16.mxu0 0
      %836 = vmatpush1.bf16.msra.mxu0 %v805
      %837 = vmatprep.subr.bf16.mxu0 0
      %838 = vmatpush1.bf16.msra.mxu0 0
      %839 = vmatprep.subr.bf16.mxu0 0
      %840 = vmatpush1.bf16.msra.mxu0 0
      %841 = vmatprep.subr.bf16.mxu0 0
      %842 = vmatpush1.bf16.msra.mxu0 0
      %843 = vmatprep.subr.bf16.mxu0 0
      %844 = vmatpush1.bf16.msra.mxu0 0
      %845 = vmatprep.subr.bf16.mxu0 0
      %846 = vmatpush1.bf16.msra.mxu0 0
      %847 = vmatprep.subr.bf16.mxu0 0
      %848 = vmatpush1.bf16.msra.mxu0 0
      %849 = vmatprep.subr.bf16.mxu0 0
      %850 = vmatpush1.bf16.msra.mxu0 0
      %851 = vmatprep.subr.bf16.mxu0 0
      %852 = vmatpush1.bf16.msra.mxu0 0
      %853 = vmatprep.subr.bf16.mxu0 0
      %854 = vmatpush1.bf16.msra.mxu0 0
      %855 = vmatprep.subr.bf16.mxu0 0
      %856 = vmatpush1.bf16.msra.mxu0 0
      %857 = vmatprep.subr.bf16.mxu0 0
      %858 = vmatpush1.bf16.msra.mxu0 0
      %859 = vmatprep.subr.bf16.mxu0 0
      %860 = vmatpush1.bf16.msra.mxu0 0
      %861 = vmatprep.subr.bf16.mxu0 0
      %862 = vmatpush1.bf16.msra.mxu0 0
      %863 = vmatprep.subr.bf16.mxu0 0
      %864 = vmatpush1.bf16.msra.mxu0 0
      %865 = vmatprep.mubr.bf16.mxu0 0
      %866 = vmatmul.mubr.bf16.gmra.mrb[0].mxu0 %v810
      %v867 = vpop.f32.mrb[0].mxu0
      %v868 = vadd.f32 %v734, %v867
      %v869 = vpop.f32.mrb[0].mxu0
      %v870 = vpop.f32.mrb[0].mxu0
      %v871 = vadd.f32 %v737, %v870
      %v872 = vpop.f32.mrb[0].mxu0
      %873 = vmatprep.mubr.bf16.mxu0 0
      %874 = vmatmul.mubr.bf16.gmra.mrb[0].mxu0 %v813
      %v875 = vpop.f32.mrb[0].mxu0
      %v876 = vadd.f32 %v742, %v875
      %v877 = vpop.f32.mrb[0].mxu0
      %v878 = vpop.f32.mrb[0].mxu0
      %v879 = vadd.f32 %v745, %v878
      %v880 = vpop.f32.mrb[0].mxu0
      %881 = vmatprep.mubr.bf16.mxu0 0
      %882 = vmatmul.mubr.bf16.gmra.mrb[0].mxu0 %v816
      %v883 = vpop.f32.mrb[0].mxu0
      %v884 = vadd.f32 %v750, %v883
      %v885 = vpop.f32.mrb[0].mxu0
      %v886 = vpop.f32.mrb[0].mxu0
      %v887 = vadd.f32 %v753, %v886
      %v888 = vpop.f32.mrb[0].mxu0
      %889 = vmatprep.mubr.bf16.mxu0 0
      %890 = vmatmul.mubr.bf16.gmra.mrb[0].mxu0 %v819
      %v891 = vpop.f32.mrb[0].mxu0
      %v892 = vadd.f32 %v758, %v891
      %v893 = vpop.f32.mrb[0].mxu0
      %v894 = vpop.f32.mrb[0].mxu0
      %v895 = vadd.f32 %v761, %v894
      %v896 = vpop.f32.mrb[0].mxu0
      %897 = vmatprep.mubr.bf16.mxu0 0
      %898 = vmatmul.mubr.bf16.gmra.mrb[0].mxu0 %v822
      %v899 = vpop.f32.mrb[0].mxu0
      %v900 = vadd.f32 %v766, %v899
      %v901 = vpop.f32.mrb[0].mxu0
      %v902 = vpop.f32.mrb[0].mxu0
      %v903 = vadd.f32 %v769, %v902
      %v904 = vpop.f32.mrb[0].mxu0
      %905 = vmatprep.mubr.bf16.mxu0 0
      %906 = vmatmul.mubr.bf16.gmra.mrb[0].mxu0 %v825
      %v907 = vpop.f32.mrb[0].mxu0
      %v908 = vadd.f32 %v774, %v907
      %v909 = vpop.f32.mrb[0].mxu0
      %v910 = vpop.f32.mrb[0].mxu0
      %v911 = vadd.f32 %v777, %v910
      %v912 = vpop.f32.mrb[0].mxu0
      %913 = vmatprep.mubr.bf16.mxu0 0
      %914 = vmatmul.mubr.bf16.gmra.mrb[0].mxu0 %v828
      %v915 = vpop.f32.mrb[0].mxu0
      %v916 = vadd.f32 %v782, %v915
      %v917 = vpop.f32.mrb[0].mxu0
      %v918 = vpop.f32.mrb[0].mxu0
      %v919 = vadd.f32 %v785, %v918
      %v920 = vpop.f32.mrb[0].mxu0
      %921 = vmatprep.mubr.bf16.mxu0 0
      %922 = vmatmul.mubr.bf16.gmra.mrb[0].mxu0 %v831
      %v923 = vpop.f32.mrb[0].mxu0
      %v924 = vadd.f32 %v790, %v923
      %v925 = vpop.f32.mrb[0].mxu0
      %v926 = vpop.f32.mrb[0].mxu0
      %v927 = vadd.f32 %v793, %v926
      %v928 = vpop.f32.mrb[0].mxu0
      %929 = vdwg.mxu0
      %v930 = vld [vmem:[%s6] sm:$0x1]
      %v932 = vlaneseq
      %v933 = vshrl.u32 %v932, 7
      %v934 = vsub.s32 0, %v933
      %v935 = vrot.slane %v930, %v934
      %v937 = vadd.f32 %v868, %v935
      %v938 = vadd.f32 %v871, %v935
      %v939 = vadd.f32 %v876, %v935
      %v940 = vadd.f32 %v879, %v935
      %v941 = vadd.f32 %v884, %v935
      %v942 = vadd.f32 %v887, %v935
      %v943 = vadd.f32 %v892, %v935
      %v944 = vadd.f32 %v895, %v935
      %v945 = vadd.f32 %v900, %v935
      %v946 = vadd.f32 %v903, %v935
      %v947 = vadd.f32 %v908, %v935
      %v948 = vadd.f32 %v911, %v935
      %v949 = vadd.f32 %v916, %v935
      %v950 = vadd.f32 %v919, %v935
      %v951 = vadd.f32 %v924, %v935
      %v952 = vadd.f32 %v927, %v935
      %vm953 = vcmp.gt.f32.partialorder %v937, 0.0
      %vm954 = vcmp.gt.f32.partialorder %v938, 0.0
      %vm955 = vcmp.gt.f32.partialorder %v939, 0.0
      %vm956 = vcmp.gt.f32.partialorder %v940, 0.0
      %vm957 = vcmp.gt.f32.partialorder %v941, 0.0
      %vm958 = vcmp.gt.f32.partialorder %v942, 0.0
      %vm959 = vcmp.gt.f32.partialorder %v943, 0.0
      %vm960 = vcmp.gt.f32.partialorder %v944, 0.0
      %vm961 = vcmp.gt.f32.partialorder %v945, 0.0
      %vm962 = vcmp.gt.f32.partialorder %v946, 0.0
      %vm963 = vcmp.gt.f32.partialorder %v947, 0.0
      %vm964 = vcmp.gt.f32.partialorder %v948, 0.0
      %vm965 = vcmp.gt.f32.partialorder %v949, 0.0
      %vm966 = vcmp.gt.f32.partialorder %v950, 0.0
      %vm967 = vcmp.gt.f32.partialorder %v951, 0.0
      %vm968 = vcmp.gt.f32.partialorder %v952, 0.0
      %v969 = vmul.f32 %v937, 0.01
      %v970 = vmul.f32 %v938, 0.01
      %v971 = vmul.f32 %v939, 0.01
      %v972 = vmul.f32 %v940, 0.01
      %v973 = vmul.f32 %v941, 0.01
      %v974 = vmul.f32 %v942, 0.01
      %v975 = vmul.f32 %v943, 0.01
      %v976 = vmul.f32 %v944, 0.01
      %v977 = vmul.f32 %v945, 0.01
      %v978 = vmul.f32 %v946, 0.01
      %v979 = vmul.f32 %v947, 0.01
      %v980 = vmul.f32 %v948, 0.01
      %v981 = vmul.f32 %v949, 0.01
      %v982 = vmul.f32 %v950, 0.01
      %v983 = vmul.f32 %v951, 0.01
      %v984 = vmul.f32 %v952, 0.01
      %v985 = vsel %vm953, %v937, %v969
      %v986 = vsel %vm954, %v938, %v970
      %v987 = vsel %vm955, %v939, %v971
      %v988 = vsel %vm956, %v940, %v972
      %v989 = vsel %vm957, %v941, %v973
      %v990 = vsel %vm958, %v942, %v974
      %v991 = vsel %vm959, %v943, %v975
      %v992 = vsel %vm960, %v944, %v976
      %v993 = vsel %vm961, %v945, %v977
      %v994 = vsel %vm962, %v946, %v978
      %v995 = vsel %vm963, %v947, %v979
      %v996 = vsel %vm964, %v948, %v980
      %v997 = vsel %vm965, %v949, %v981
      %v998 = vsel %vm966, %v950, %v982
      %v999 = vsel %vm967, %v951, %v983
      %v1000 = vsel %vm968, %v952, %v984
      %v1001 = vld [vmem:[%s7] sm:$0x1]
      %v1003 = vlaneseq
      %v1004 = vshrl.u32 %v1003, 7
      %v1005 = vsub.s32 0, %v1004
      %v1006 = vrot.slane %v1001, %v1005
      %v1008 = vmul.f32 %v985, %v1006
      %v1009 = vmul.f32 %v986, %v1006
      %v1010 = vmul.f32 %v987, %v1006
      %v1011 = vmul.f32 %v988, %v1006
      %v1012 = vmul.f32 %v989, %v1006
      %v1013 = vmul.f32 %v990, %v1006
      %v1014 = vmul.f32 %v991, %v1006
      %v1015 = vmul.f32 %v992, %v1006
      %v1016 = vmul.f32 %v993, %v1006
      %v1017 = vmul.f32 %v994, %v1006
      %v1018 = vmul.f32 %v995, %v1006
      %v1019 = vmul.f32 %v996, %v1006
      %v1020 = vmul.f32 %v997, %v1006
      %v1021 = vmul.f32 %v998, %v1006
      %v1022 = vmul.f32 %v999, %v1006
      %v1023 = vmul.f32 %v1000, %v1006
      %v1024 = vsel %vm808, %v1008, 0.0
      %1025 = vadd.xlane.f32.xlu0 %v1024
      %v1026 = vpop.xlane.xlu0 %1025
      %v1027 = vsel %vm808, %v1009, 0.0
      %1028 = vadd.xlane.f32.xlu0 %v1027
      %v1029 = vpop.xlane.xlu0 %1028
      %v1030 = vsel %vm808, %v1010, 0.0
      %1031 = vadd.xlane.f32.xlu0 %v1030
      %v1032 = vpop.xlane.xlu0 %1031
      %v1033 = vsel %vm808, %v1011, 0.0
      %1034 = vadd.xlane.f32.xlu0 %v1033
      %v1035 = vpop.xlane.xlu0 %1034
      %v1036 = vsel %vm808, %v1012, 0.0
      %1037 = vadd.xlane.f32.xlu0 %v1036
      %v1038 = vpop.xlane.xlu0 %1037
      %v1039 = vsel %vm808, %v1013, 0.0
      %1040 = vadd.xlane.f32.xlu0 %v1039
      %v1041 = vpop.xlane.xlu0 %1040
      %v1042 = vsel %vm808, %v1014, 0.0
      %1043 = vadd.xlane.f32.xlu0 %v1042
      %v1044 = vpop.xlane.xlu0 %1043
      %v1045 = vsel %vm808, %v1015, 0.0
      %1046 = vadd.xlane.f32.xlu0 %v1045
      %v1047 = vpop.xlane.xlu0 %1046
      %v1048 = vsel %vm808, %v1016, 0.0
      %1049 = vadd.xlane.f32.xlu0 %v1048
      %v1050 = vpop.xlane.xlu0 %1049
      %v1051 = vsel %vm808, %v1017, 0.0
      %1052 = vadd.xlane.f32.xlu0 %v1051
      %v1053 = vpop.xlane.xlu0 %1052
      %v1054 = vsel %vm808, %v1018, 0.0
      %1055 = vadd.xlane.f32.xlu0 %v1054
      %v1056 = vpop.xlane.xlu0 %1055
      %v1057 = vsel %vm808, %v1019, 0.0
      %1058 = vadd.xlane.f32.xlu0 %v1057
      %v1059 = vpop.xlane.xlu0 %1058
      %v1060 = vsel %vm808, %v1020, 0.0
      %1061 = vadd.xlane.f32.xlu0 %v1060
      %v1062 = vpop.xlane.xlu0 %1061
      %v1063 = vsel %vm808, %v1021, 0.0
      %1064 = vadd.xlane.f32.xlu0 %v1063
      %v1065 = vpop.xlane.xlu0 %1064
      %v1066 = vsel %vm808, %v1022, 0.0
      %1067 = vadd.xlane.f32.xlu0 %v1066
      %v1068 = vpop.xlane.xlu0 %1067
      %v1069 = vsel %vm808, %v1023, 0.0
      %1070 = vadd.xlane.f32.xlu0 %v1069
      %v1071 = vpop.xlane.xlu0 %1070
      %s1072 = sld [smem:[#allocation2]]
      %v1073 = vstv %s1072
      %v1074 = vadd.f32 %v1026, %v1073
      %v1075 = vadd.f32 %v1029, %v1073
      %v1076 = vadd.f32 %v1032, %v1073
      %v1077 = vadd.f32 %v1035, %v1073
      %v1078 = vadd.f32 %v1038, %v1073
      %v1079 = vadd.f32 %v1041, %v1073
      %v1080 = vadd.f32 %v1044, %v1073
      %v1081 = vadd.f32 %v1047, %v1073
      %v1082 = vadd.f32 %v1050, %v1073
      %v1083 = vadd.f32 %v1053, %v1073
      %v1084 = vadd.f32 %v1056, %v1073
      %v1085 = vadd.f32 %v1059, %v1073
      %v1086 = vadd.f32 %v1062, %v1073
      %v1087 = vadd.f32 %v1065, %v1073
      %v1088 = vadd.f32 %v1068, %v1073
      %v1089 = vadd.f32 %v1071, %v1073
      %vm1090 = vcmask 7168
      %1091 = vst.msk [vmem:[%s357] sm:$0xff] %vm1090, %v1074
      %1092 = vst.msk [vmem:[%s357 + $0x8] sm:$0xff] %vm1090, %v1075
      %1093 = vst.msk [vmem:[%s357 + $0x10] sm:$0xff] %vm1090, %v1076
      %1094 = vst.msk [vmem:[%s357 + $0x18] sm:$0xff] %vm1090, %v1077
      %1095 = vst.msk [vmem:[%s357 + $0x20] sm:$0xff] %vm1090, %v1078
      %1096 = vst.msk [vmem:[%s357 + $0x28] sm:$0xff] %vm1090, %v1079
      %1097 = vst.msk [vmem:[%s357 + $0x30] sm:$0xff] %vm1090, %v1080
      %1098 = vst.msk [vmem:[%s357 + $0x38] sm:$0xff] %vm1090, %v1081
      %1099 = vst.msk [vmem:[%s357 + $0x40] sm:$0xff] %vm1090, %v1082
      %1100 = vst.msk [vmem:[%s357 + $0x48] sm:$0xff] %vm1090, %v1083
      %1101 = vst.msk [vmem:[%s357 + $0x50] sm:$0xff] %vm1090, %v1084
      %1102 = vst.msk [vmem:[%s357 + $0x58] sm:$0xff] %vm1090, %v1085
      %1103 = vst.msk [vmem:[%s357 + $0x60] sm:$0xff] %vm1090, %v1086
      %1104 = vst.msk [vmem:[%s357 + $0x68] sm:$0xff] %vm1090, %v1087
      %1105 = vst.msk [vmem:[%s357 + $0x70] sm:$0xff] %vm1090, %v1088
      %1106 = vst.msk [vmem:[%s357 + $0x78] sm:$0xff] %vm1090, %v1089
      %s1107 = smul.u32 16, %s21
      %p1108 = scmp.lt.s32.totalorder %s1107, 31
      %s1109 = scalar_select %p1108, %s1107, 31
      %s1110 = smul.addr %s1109, 8
      %s1111 = scalar_lea.vmem %s9, %s1110
      // Predicated region
      $region57: #{tpu_custom_call.1} parent=55 // pred_check
        %p1112 = pneg %p238
      $region58: #{tpu_custom_call.1} parent=55 // pred_check_branch
        %1114 = sbr.rel (%p1112) target = $region60
      $region59: #{tpu_custom_call.1} parent=55 // pred_region
        %s1115 = smul.u32 16, %s21
      $region60: #{tpu_custom_call.1} parent=55 // pred_fallthru
        _
    $region56: #{tpu_custom_call.1} parent=5 // pred_fallthru
      _
    %p1116 = scmp.le.s32.totalorder 2, %s16
    // Predicated region
    $region61: #{tpu_custom_call.1} parent=5 // pred_check
      %p1117 = pneg %p1116
    $region62: #{tpu_custom_call.1} parent=5 // pred_check_branch
      %1119 = sbr.rel (%p1117) target = $region64
    $region63: #{tpu_custom_call.1} parent=5 // pred_region
      %s1120 = ssub.s32 %s16, 2
      // Predicated region
      $region65: #{tpu_custom_call.1} parent=63 // pred_check
        %p1121 = pneg %p244
      $region66: #{tpu_custom_call.1} parent=63 // pred_check_branch
        %1123 = sbr.rel (%p1121) target = $region68
      $region67: #{tpu_custom_call.1} parent=63 // pred_region
        %s1124 = smul.u32 16, %s22
        %p1125 = scmp.lt.s32.totalorder %s1124, 31
        %s1126 = scalar_select %p1125, %s1124, 31
        %s1127 = smul.addr %s1126, 8
        %s1128 = scalar_lea.vmem %s9, %s1127
      $region68: #{tpu_custom_call.1} parent=63 // pred_fallthru
        _
    $region64: #{tpu_custom_call.1} parent=5 // pred_fallthru
      _
  $region6: #{tpu_custom_call.1} parent=0 // loop_footer
    %s20 = sadd.s32 1, %s16
  $region7: #{tpu_custom_call.1} parent=0 // loop_footer_branch
    %15 = sbr.rel target = $region3
  $region8: #{tpu_custom_call.1} parent=0 // loop_exit
    _

</llo_original>
